<compile_context>
chip_gen: v7x
topology: tpu7x:2x2x1
jax: 0.10.0
libtpu: 0.0.40
codegen_flags: <defaults>
</compile_context>

<pallas_src>
import jax
import jax.numpy as jnp
from jax.experimental import pallas as pl
from jax.experimental.pallas import tpu as pltpu

_LANE = 128
_SUBLANE = 8


def _round_up(n, m):
    return ((n + m - 1) // m) * m


def _pad2d(a, rows, cols):
    pr, pc = rows - a.shape[0], cols - a.shape[1]
    if pr or pc:
        a = jnp.pad(a, ((0, pr), (0, pc)))
    return a


def _vmem_capacity_bytes():
    try:
        return int(pltpu.get_tpu_info().vmem_capacity_bytes)
    except Exception:
        return 64 * 1024 * 1024  # conservative fallback (v7x per-TensorCore)


def _resnet_kernel(x_ref, w1_ref, b1_ref, w2_ref, b2_ref, o_ref):
    x_in = x_ref[...]                                # (bb, Dp), bf16 in HBM/VMEM
    x_f32 = x_in.astype(jnp.float32)                 # residual path in f32 (VPU)
    x_mxu = x_in.astype(w1_ref.dtype)                # bf16 MXU operands
    # lin1: MXU matmul with f32 accumulation; bias + ReLU on the VPU in f32.
    h = jnp.dot(x_mxu, w1_ref[...], preferred_element_type=jnp.float32)
    h = jnp.maximum(h + b1_ref[...], 0.0)
    # lin2 + bias + residual (residual added in f32).
    y = jnp.dot(h.astype(w2_ref.dtype), w2_ref[...],
                preferred_element_type=jnp.float32)
    o_ref[...] = (y + b2_ref[...] + x_f32).astype(o_ref.dtype)


def _pick_block_b(b_pad, usable, fixed_bytes, per_row_bytes):
    if b_pad < 16:
        return b_pad                                  # single tiny tile
    # Guarantee >=2 grid steps: batch is the only "parallel" axis (2 TCs on v7x).
    half = _round_up((b_pad + 1) // 2, _SUBLANE)
    budget_rows = max((usable - fixed_bytes - (2 << 20)) // per_row_bytes, _SUBLANE)
    budget_rows = (budget_rows // _SUBLANE) * _SUBLANE
    # Prefer 512-row tiles (near HBM roofline, long MXU runs), capped by the
    # half-split rule and the VMEM budget.
    return int(max(_SUBLANE, min(512, half, budget_rows)))


def prepare_params(w1, b1, w2, b2, *, mxu_dtype=jnp.bfloat16):
    """Pad + cast the weights/biases ONCE (hoisted out of the per-call path)."""
    w1 = jnp.asarray(w1)
    w2 = jnp.asarray(w2)
    b1 = jnp.asarray(b1).reshape(1, -1)
    b2 = jnp.asarray(b2).reshape(1, -1)
    D = w1.shape[0]
    Dp = _round_up(D, _LANE)                          # lane-dense feature axis
    w1p = _pad2d(w1, Dp, Dp).astype(mxu_dtype)
    w2p = _pad2d(w2, Dp, Dp).astype(mxu_dtype)
    b1p = _pad2d(b1.astype(jnp.float32), 1, Dp)
    b2p = _pad2d(b2.astype(jnp.float32), 1, Dp)
    return (D, w1p, b1p, w2p, b2p)


def resnet_forward(x, prepared, *, x_hbm_dtype=jnp.bfloat16, out_dtype=None,
                   block_b=None):
    """x: (B, D); prepared: output of prepare_params (padded bf16 weights)."""
    D, w1p, b1p, w2p, b2p = prepared
    B, Dx = x.shape
    assert Dx == D, f"feature dim mismatch: x has {Dx}, params have {D}"
    Dp = w1p.shape[0]
    out_dtype = x.dtype if out_dtype is None else out_dtype

    cap = _vmem_capacity_bytes()
    usable = int(cap * 0.85)                          # headroom for compiler temps
    # Deeper x buffering only on 128-MiB parts (v5e/v6e); 2 buffers on v7x.
    x_bufs = 3 if cap >= 100 * 1024 * 1024 else 2

    x_item = jnp.dtype(x_hbm_dtype).itemsize
    out_item = jnp.dtype(out_dtype).itemsize
    w_item = jnp.dtype(w1p.dtype).itemsize

    # Fixed (grid-invariant) VMEM: single-buffered weights + biases.
    fixed_bytes = 2 * Dp * Dp * w_item + 2 * _SUBLANE * Dp * 4
    # Per-batch-row VMEM: x tiles + out tiles (double-buffered) + f32 in-kernel temps.
    per_row_bytes = Dp * (x_item * x_bufs + out_item * 2 + 4 * 3)

    b_pad = _round_up(B, _SUBLANE)
    if block_b is None:
        block_b = _pick_block_b(b_pad, usable, fixed_bytes, per_row_bytes)
    Bp = _round_up(b_pad, block_b)
    num_steps = Bp // block_b
    grid = (num_steps,)
    if num_steps < 3:
        x_bufs = 2                                    # no point in 3-deep buffering

    need = fixed_bytes + per_row_bytes * block_b + (4 << 20)
    vmem_limit = int(min(usable, max(need, 32 * 1024 * 1024)))

    # Zero padding keeps the math exact (padded rows/cols are sliced off).
    xp = _pad2d(x.astype(x_hbm_dtype), Bp, Dp)

    flops = 4 * Bp * Dp * Dp                          # two (Bp,Dp)x(Dp,Dp) matmuls
    bytes_accessed = (Bp * Dp * x_item + Bp * Dp * out_item
                      + 2 * Dp * Dp * w_item + 2 * Dp * 4)
    cost = pl.CostEstimate(flops=int(flops), transcendentals=0,
                           bytes_accessed=int(bytes_accessed))

    out = pl.pallas_call(
        _resnet_kernel,
        out_shape=jax.ShapeDtypeStruct((Bp, Dp), out_dtype),
        grid_spec=pltpu.PrefetchScalarGridSpec(
            num_scalar_prefetch=0,
            grid=grid,
            in_specs=[
                pl.BlockSpec((block_b, Dp), lambda i: (i, 0),
                             pipeline_mode=pl.Buffered(x_bufs)),   # x tile
                pl.BlockSpec((Dp, Dp), lambda i: (0, 0),
                             pipeline_mode=pl.Buffered(1)),        # w1 (resident)
                pl.BlockSpec((1, Dp), lambda i: (0, 0),
                             pipeline_mode=pl.Buffered(1)),        # b1
                pl.BlockSpec((Dp, Dp), lambda i: (0, 0),
                             pipeline_mode=pl.Buffered(1)),        # w2 (resident)
                pl.BlockSpec((1, Dp), lambda i: (0, 0),
                             pipeline_mode=pl.Buffered(1)),        # b2
            ],
            out_specs=pl.BlockSpec((block_b, Dp), lambda i: (i, 0)),
        ),
        compiler_params=pltpu.CompilerParams(
            dimension_semantics=("parallel",),
            vmem_limit_bytes=vmem_limit,
        ),
        cost_estimate=cost,
    )(xp, w1p, b1p, w2p, b2p)

    return out[:B, :D]


def resnet_reference(x, w1, b1, w2, b2):
    h = jnp.maximum(x @ w1 + jnp.asarray(b1).reshape(1, -1), 0.0)
    return h @ w2 + jnp.asarray(b2).reshape(1, -1) + x


def init_params(key, in_dim):
    """Deterministic init mimicking nn.Linear default (uniform +-1/sqrt(in_dim))."""
    k1, k2, k3, k4 = jax.random.split(key, 4)
    bound = 1.0 / jnp.sqrt(in_dim)
    # Stored as (in_dim, out_dim) — transpose of PyTorch's (out, in).
    w1 = jax.random.uniform(k1, (in_dim, in_dim), jnp.float32, -bound, bound)
    b1 = jax.random.uniform(k2, (1, in_dim), jnp.float32, -bound, bound)
    w2 = jax.random.uniform(k3, (in_dim, in_dim), jnp.float32, -bound, bound)
    b2 = jax.random.uniform(k4, (1, in_dim), jnp.float32, -bound, bound)
    return w1, b1, w2, b2


if __name__ == "__main__":
    key = jax.random.PRNGKey(0)
    kx, kp = jax.random.split(key)

    # Small shapes consistent with the module.
    batch, in_dim = 8, 32
    x = jax.random.normal(kx, (batch, in_dim), jnp.float32)
    params = init_params(kp, in_dim)
    prepared = prepare_params(*params)          # pad + bf16 cast, done once

    out = jax.block_until_ready(resnet_forward(x, prepared))
    ref = resnet_reference(x, *params)
    assert out.shape == (batch, in_dim)
    assert out.dtype == x.dtype
    # bf16 MXU operands + bf16 x in HBM (f32 accumulate, f32 residual add) ->
    # ~1e-2-level deviation vs pure-f32 ref.
    assert jnp.allclose(out, ref, atol=3e-2, rtol=3e-2), "mismatch vs reference"

    # Second shape: exercises feature padding (96 -> 128) and a multi-step
    # batch grid (300 rows -> 2 tiles of 152 after padding, >=2 "parallel" steps).
    kx2, kp2 = jax.random.split(jax.random.PRNGKey(1))
    batch2, in_dim2 = 300, 96
    x2 = jax.random.normal(kx2, (batch2, in_dim2), jnp.float32)
    params2 = init_params(kp2, in_dim2)
    prepared2 = prepare_params(*params2)
    out2 = jax.block_until_ready(resnet_forward(x2, prepared2))
    ref2 = resnet_reference(x2, *params2)
    assert out2.shape == (batch2, in_dim2)
    assert jnp.allclose(out2, ref2, atol=3e-2, rtol=3e-2), "mismatch vs reference (tiled)"

    print("KERNEL_OK")
</pallas_src>

<mosaic_0001>
module attributes {stable_mosaic.version = 11 : i64} {
  func.func @_resnet_kernel(%arg0: i32, %arg1: memref<8x128xbf16, #tpu.memory_space<vmem>>, %arg2: memref<128x128xbf16, #tpu.memory_space<vmem>>, %arg3: memref<1x128xf32, #tpu.memory_space<vmem>>, %arg4: memref<128x128xbf16, #tpu.memory_space<vmem>>, %arg5: memref<1x128xf32, #tpu.memory_space<vmem>>, %arg6: memref<8x128xf32, #tpu.memory_space<vmem>>) attributes {dimension_semantics = [#tpu.dimension_semantics<parallel>], iteration_bounds = array<i64: 1>, scalar_prefetch = 0 : i64, scratch_operands = 0 : i64, tpu.core_type = #tpu.core_type<tc>, window_params = [{pipeline_mode = #tpu.pipeline_mode<double_buffered>, transform_indices = @transform_0, window_bounds = array<i64: 8, 128>}, {pipeline_mode = #tpu.pipeline_mode<synchronous>, transform_indices = @transform_1, window_bounds = array<i64: 128, 128>}, {pipeline_mode = #tpu.pipeline_mode<synchronous>, transform_indices = @transform_2, window_bounds = array<i64: 1, 128>}, {pipeline_mode = #tpu.pipeline_mode<synchronous>, transform_indices = @transform_3, window_bounds = array<i64: 128, 128>}, {pipeline_mode = #tpu.pipeline_mode<synchronous>, transform_indices = @transform_4, window_bounds = array<i64: 1, 128>}, {transform_indices = @transform_5, window_bounds = array<i64: 8, 128>}]} {
    %c0 = arith.constant 0 : index
    %c0_0 = arith.constant 0 : index
    %0 = vector.load %arg1[%c0, %c0_0] : memref<8x128xbf16, #tpu.memory_space<vmem>>, vector<8x128xbf16>
    %1 = arith.extf %0 : vector<8x128xbf16> to vector<8x128xf32>
    %c0_1 = arith.constant 0 : index
    %c0_2 = arith.constant 0 : index
    %2 = vector.load %arg2[%c0_1, %c0_2] : memref<128x128xbf16, #tpu.memory_space<vmem>>, vector<128x128xbf16>
    %cst = arith.constant dense<0.000000e+00> : vector<8x128xf32>
    %3 = tpu.matmul %0, %2, %cst {dimension_numbers = #tpu.dot_dimension_numbers<[1], [0], [0], [1], [0, 0, 1, 1], [], []>} : vector<8x128xbf16>, vector<128x128xbf16>, vector<8x128xf32> -> vector<8x128xf32>
    %c0_3 = arith.constant 0 : index
    %c0_4 = arith.constant 0 : index
    %4 = vector.load %arg3[%c0_3, %c0_4] : memref<1x128xf32, #tpu.memory_space<vmem>>, vector<1x128xf32>
    %5 = vector.broadcast %4 : vector<1x128xf32> to vector<8x128xf32>
    %6 = arith.addf %3, %5 : vector<8x128xf32>
    %cst_5 = arith.constant 0.000000e+00 : f32
    %7 = vector.broadcast %cst_5 : f32 to vector<8x128xf32>
    %8 = arith.maximumf %6, %7 : vector<8x128xf32>
    %9 = arith.truncf %8 : vector<8x128xf32> to vector<8x128xbf16>
    %c0_6 = arith.constant 0 : index
    %c0_7 = arith.constant 0 : index
    %10 = vector.load %arg4[%c0_6, %c0_7] : memref<128x128xbf16, #tpu.memory_space<vmem>>, vector<128x128xbf16>
    %cst_8 = arith.constant dense<0.000000e+00> : vector<8x128xf32>
    %11 = tpu.matmul %9, %10, %cst_8 {dimension_numbers = #tpu.dot_dimension_numbers<[1], [0], [0], [1], [0, 0, 1, 1], [], []>} : vector<8x128xbf16>, vector<128x128xbf16>, vector<8x128xf32> -> vector<8x128xf32>
    %c0_9 = arith.constant 0 : index
    %c0_10 = arith.constant 0 : index
    %12 = vector.load %arg5[%c0_9, %c0_10] : memref<1x128xf32, #tpu.memory_space<vmem>>, vector<1x128xf32>
    %13 = vector.broadcast %12 : vector<1x128xf32> to vector<8x128xf32>
    %14 = arith.addf %11, %13 : vector<8x128xf32>
    %15 = arith.addf %14, %1 : vector<8x128xf32>
    %c0_11 = arith.constant 0 : index
    %c0_12 = arith.constant 0 : index
    %16 = vector.load %arg6[%c0_11, %c0_12] : memref<8x128xf32, #tpu.memory_space<vmem>>, vector<8x128xf32>
    tpu.vector_store %arg6[%c0_11, %c0_12], %15 {strides = array<i32>} : memref<8x128xf32, #tpu.memory_space<vmem>>, vector<8x128xf32>,
    return
  }
  func.func @transform_0(%arg0: i32) -> (i32, i32) {
    %c0_i32 = arith.constant 0 : i32
    %c0_i32_0 = arith.constant 0 : i32
    return %arg0, %c0_i32 : i32, i32
  }
  func.func @transform_1(%arg0: i32) -> (i32, i32) {
    %c0_i32 = arith.constant 0 : i32
    %c0_i32_0 = arith.constant 0 : i32
    %c0_i32_1 = arith.constant 0 : i32
    return %c0_i32, %c0_i32_0 : i32, i32
  }
  func.func @transform_2(%arg0: i32) -> (i32, i32) {
    %c0_i32 = arith.constant 0 : i32
    %c0_i32_0 = arith.constant 0 : i32
    %c0_i32_1 = arith.constant 0 : i32
    return %c0_i32, %c0_i32_0 : i32, i32
  }
  func.func @transform_3(%arg0: i32) -> (i32, i32) {
    %c0_i32 = arith.constant 0 : i32
    %c0_i32_0 = arith.constant 0 : i32
    %c0_i32_1 = arith.constant 0 : i32
    return %c0_i32, %c0_i32_0 : i32, i32
  }
  func.func @transform_4(%arg0: i32) -> (i32, i32) {
    %c0_i32 = arith.constant 0 : i32
    %c0_i32_0 = arith.constant 0 : i32
    %c0_i32_1 = arith.constant 0 : i32
    return %c0_i32, %c0_i32_0 : i32, i32
  }
  func.func @transform_5(%arg0: i32) -> (i32, i32) {
    %c0_i32 = arith.constant 0 : i32
    %c0_i32_0 = arith.constant 0 : i32
    return %arg0, %c0_i32 : i32, i32
  }
}

</mosaic_0001>

<llo_original>
// kernel: tpu_custom_call.1
$region0: #{tpu_custom_call.1}
  #allocation0 [shape = 'u32[]', space=smem, size = 0x4, offset = 0x4, fixed_abs, tag = 'smem constant byte address 0x4 - core index']
  #allocation1 [shape = 'u32[144,128]{1,0:T(1,128)}', space=vmem, size = 0x12000, scoped, tag = 'internal scratch']
  %s0 = inlined_call_operand.hbm [shape: bf16[8,128], index: 0, kind: input, shape index: {}]
  %s1 = inlined_call_operand.hbm [shape: bf16[128,128], index: 1, kind: input, shape index: {}]
  %s2 = inlined_call_operand.vmem [shape: f32[1,128], index: 2, kind: input, shape index: {}]
  %s3 = inlined_call_operand.hbm [shape: bf16[128,128], index: 3, kind: input, shape index: {}]
  %s4 = inlined_call_operand.vmem [shape: f32[1,128], index: 4, kind: input, shape index: {}]
  %s5 = inlined_call_operand.hbm [shape: f32[8,128], index: 5, kind: output, shape index: {}]
  %s6 = sld [smem:[#allocation0]]
  $region42: #{tpu_custom_call.1} parent=0
    _
  %s8 = ssub.s32 1, %s6
  %s9 = scalar_select 0, %s8, %s6
  $region1: #{tpu_custom_call.1} parent=0
    #allocation2 [shape = 'u8[2048]{0}', space=vmem, size = 0x800, scoped, tag = 'input window, operand 0, single buffered']
    #allocation3 [shape = 's32[1]{0}', space=sflag, size = 0x4, scoped, tag = 'scoped memory for tpu_custom_call.1']
    #allocation4 [shape = 's32[1]{0}', space=sflag, size = 0x4, scoped, tag = 'scoped memory for tpu_custom_call.1']
    #allocation5 [shape = 'u8[32768]{0}', space=vmem, size = 0x8000, scoped, tag = 'input window, operand 1, single buffered']
    #allocation6 [shape = 's32[1]{0}', space=sflag, size = 0x4, scoped, tag = 'scoped memory for tpu_custom_call.1']
    #allocation7 [shape = 'u8[32768]{0}', space=vmem, size = 0x8000, scoped, tag = 'input window, operand 3, single buffered']
    #allocation8 [shape = 'u8[4096]{0}', space=vmem, size = 0x1000, scoped, tag = 'output window, operand 0, single buffered']
    %10 = vsyncpa [#allocation3], 0
    %11 = vsyncpa [#allocation6], 0
    %12 = vsyncpa [#allocation4], 0
    // Predicated region
    $region2: #{tpu_custom_call.1} parent=1 // pred_check
      _
    $region3: #{tpu_custom_call.1} parent=1 // pred_check_branch
      %14 = sbr.rel (0) target = $region5
    $region4: #{tpu_custom_call.1} parent=1 // pred_region
      %s16 = ssub.s32 64, 64
      %17 = vsyncadd [#allocation3], %s16
      %s19 = sshll.u32 [#allocation2], 4
      %s20 = int_to_ptr.vmem [resolvable:$true] %s19
      %22 = dma.hbm_to_vmem [thread:$0]  %s0, 64, %s20, [#allocation3]
    $region5: #{tpu_custom_call.1} parent=1 // pred_fallthru
      _
    // Predicated region
    $region6: #{tpu_custom_call.1} parent=1 // pred_check
      _
    $region7: #{tpu_custom_call.1} parent=1 // pred_check_branch
      %24 = sbr.rel (0) target = $region9
    $region8: #{tpu_custom_call.1} parent=1 // pred_region
      %s26 = ssub.s32 1024, 1024
      %27 = vsyncadd [#allocation6], %s26
      %s28 = sshll.u32 [#allocation5], 4
      %s29 = int_to_ptr.vmem [resolvable:$true] %s28
      %34 = dma.hbm_to_vmem [thread:$0]  %s1, 1024, %s29, [#allocation6], 64, 64, 4
    $region9: #{tpu_custom_call.1} parent=1 // pred_fallthru
      _
    // Predicated region
    $region10: #{tpu_custom_call.1} parent=1 // pred_check
      _
    $region11: #{tpu_custom_call.1} parent=1 // pred_check_branch
      %36 = sbr.rel (0) target = $region13
    $region12: #{tpu_custom_call.1} parent=1 // pred_region
      _
    $region13: #{tpu_custom_call.1} parent=1 // pred_fallthru
      _
    // Predicated region
    $region14: #{tpu_custom_call.1} parent=1 // pred_check
      _
    $region15: #{tpu_custom_call.1} parent=1 // pred_check_branch
      %38 = sbr.rel (0) target = $region17
    $region16: #{tpu_custom_call.1} parent=1 // pred_region
      %s40 = ssub.s32 1024, 1024
      %41 = vsyncadd [#allocation6], %s40
      %s42 = sshll.u32 [#allocation7], 4
      %s43 = int_to_ptr.vmem [resolvable:$true] %s42
      %48 = dma.hbm_to_vmem [thread:$0]  %s3, 1024, %s43, [#allocation6], 64, 64, 4
    $region17: #{tpu_custom_call.1} parent=1 // pred_fallthru
      _
    // Predicated region
    $region18: #{tpu_custom_call.1} parent=1 // pred_check
      _
    $region19: #{tpu_custom_call.1} parent=1 // pred_check_branch
      %50 = sbr.rel (0) target = $region21
    $region20: #{tpu_custom_call.1} parent=1 // pred_region
      _
    $region21: #{tpu_custom_call.1} parent=1 // pred_fallthru
      _
    // Predicated region
    $region22: #{tpu_custom_call.1} parent=1 // pred_check
      _
    $region23: #{tpu_custom_call.1} parent=1 // pred_check_branch
      %52 = sbr.rel (0) target = $region25
    $region24: #{tpu_custom_call.1} parent=1 // pred_region
      %53 = dma.done [#allocation3], 64
    $region25: #{tpu_custom_call.1} parent=1 // pred_fallthru
      _
    // Predicated region
    $region26: #{tpu_custom_call.1} parent=1 // pred_check
      _
    $region27: #{tpu_custom_call.1} parent=1 // pred_check_branch
      %55 = sbr.rel (0) target = $region29
    $region28: #{tpu_custom_call.1} parent=1 // pred_region
      %56 = dma.done [#allocation6], 1024
    $region29: #{tpu_custom_call.1} parent=1 // pred_fallthru
      _
    // Predicated region
    $region30: #{tpu_custom_call.1} parent=1 // pred_check
      _
    $region31: #{tpu_custom_call.1} parent=1 // pred_check_branch
      %58 = sbr.rel (0) target = $region33
    $region32: #{tpu_custom_call.1} parent=1 // pred_region
      %59 = dma.done [#allocation6], 1024
    $region33: #{tpu_custom_call.1} parent=1 // pred_fallthru
      _
    %v61 = vld [vmem:[#allocation2] sm:$0xf]
    %v62 = vunpack.c.l.bf16 %v61
    %v63 = vld [vmem:[#allocation5] sm:$0xf]
    %v64 = vld [vmem:[#allocation5 + $0x4] sm:$0xf]
    %v65 = vld [vmem:[#allocation5 + $0x8] sm:$0xf]
    %v66 = vld [vmem:[#allocation5 + $0xc] sm:$0xf]
    %v67 = vld [vmem:[#allocation5 + $0x10] sm:$0xf]
    %v68 = vld [vmem:[#allocation5 + $0x14] sm:$0xf]
    %v69 = vld [vmem:[#allocation5 + $0x18] sm:$0xf]
    %v70 = vld [vmem:[#allocation5 + $0x1c] sm:$0xf]
    %v71 = vld [vmem:[#allocation5 + $0x20] sm:$0xf]
    %v72 = vld [vmem:[#allocation5 + $0x24] sm:$0xf]
    %v73 = vld [vmem:[#allocation5 + $0x28] sm:$0xf]
    %v74 = vld [vmem:[#allocation5 + $0x2c] sm:$0xf]
    %v75 = vld [vmem:[#allocation5 + $0x30] sm:$0xf]
    %v76 = vld [vmem:[#allocation5 + $0x34] sm:$0xf]
    %v77 = vld [vmem:[#allocation5 + $0x38] sm:$0xf]
    %v78 = vld [vmem:[#allocation5 + $0x3c] sm:$0xf]
    %v79 = vld [vmem:[%s2] sm:$0x1]
    %v81 = vlaneseq
    %v82 = vshrl.u32 %v81, 7
    %v83 = vsub.s32 0, %v82
    %v84 = vrot.slane %v79, %v83
    %v102 = vunpack.c.l.b16 %v63
    %v103 = vunpack.c.l.b16 %v64
    %v104 = vunpack.c.l.b16 %v65
    %v105 = vunpack.c.l.b16 %v66
    %v106 = vunpack.c.l.b16 %v67
    %v107 = vunpack.c.l.b16 %v68
    %v108 = vunpack.c.l.b16 %v69
    %v109 = vunpack.c.l.b16 %v70
    %v110 = vunpack.c.l.b16 %v71
    %v111 = vunpack.c.l.b16 %v72
    %v112 = vunpack.c.l.b16 %v73
    %v113 = vunpack.c.l.b16 %v74
    %v114 = vunpack.c.l.b16 %v75
    %v115 = vunpack.c.l.b16 %v76
    %v116 = vunpack.c.l.b16 %v77
    %v117 = vunpack.c.l.b16 %v78
    %v118 = vpack.c.b16 %v103, %v102
    %v119 = vpack.c.b16 %v105, %v104
    %v120 = vpack.c.b16 %v107, %v106
    %v121 = vpack.c.b16 %v109, %v108
    %v122 = vpack.c.b16 %v111, %v110
    %v123 = vpack.c.b16 %v113, %v112
    %v124 = vpack.c.b16 %v115, %v114
    %v125 = vpack.c.b16 %v117, %v116
    %134 = vmatprep.subr.bf16.mxu0 0
    %135 = vmatpush1.bf16.msra.mxu0 %v118
    %136 = vmatprep.subr.bf16.mxu0 0
    %137 = vmatpush1.bf16.msra.mxu0 %v119
    %138 = vmatprep.subr.bf16.mxu0 0
    %139 = vmatpush1.bf16.msra.mxu0 %v120
    %140 = vmatprep.subr.bf16.mxu0 0
    %141 = vmatpush1.bf16.msra.mxu0 %v121
    %142 = vmatprep.subr.bf16.mxu0 0
    %143 = vmatpush1.bf16.msra.mxu0 %v122
    %144 = vmatprep.subr.bf16.mxu0 0
    %145 = vmatpush1.bf16.msra.mxu0 %v123
    %146 = vmatprep.subr.bf16.mxu0 0
    %147 = vmatpush1.bf16.msra.mxu0 %v124
    %148 = vmatprep.subr.bf16.mxu0 0
    %149 = vmatpush1.bf16.msra.mxu0 %v125
    %150 = vmatprep.subr.bf16.mxu0 0
    %151 = vmatpush1.bf16.msra.mxu0 0
    %152 = vmatprep.subr.bf16.mxu0 0
    %153 = vmatpush1.bf16.msra.mxu0 0
    %154 = vmatprep.subr.bf16.mxu0 0
    %155 = vmatpush1.bf16.msra.mxu0 0
    %156 = vmatprep.subr.bf16.mxu0 0
    %157 = vmatpush1.bf16.msra.mxu0 0
    %158 = vmatprep.subr.bf16.mxu0 0
    %159 = vmatpush1.bf16.msra.mxu0 0
    %160 = vmatprep.subr.bf16.mxu0 0
    %161 = vmatpush1.bf16.msra.mxu0 0
    %162 = vmatprep.subr.bf16.mxu0 0
    %163 = vmatpush1.bf16.msra.mxu0 0
    %164 = vmatprep.subr.bf16.mxu0 0
    %165 = vmatpush1.bf16.msra.mxu0 0
    %166 = vmatprep.mubr.bf16.mxu0 0
    %167 = vmatmul.mubr.bf16.gmra.mrb[0].mxu0 %v61
    %v168 = vpop.f32.mrb[0].mxu0
    %v169 = vadd.f32 %v84, %v168
    %v170 = vpop.f32.mrb[0].mxu0
    %v171 = vpop.f32.mrb[0].mxu0
    %v172 = vpop.f32.mrb[0].mxu0
    %173 = vdwg.mxu0
    %v174 = vmax.f32 %v169, 0.0
    %v175 = vpack.c.bf16 %v174, %v174
    %v176 = vld [vmem:[#allocation7] sm:$0xf]
    %v177 = vld [vmem:[#allocation7 + $0x4] sm:$0xf]
    %v178 = vld [vmem:[#allocation7 + $0x8] sm:$0xf]
    %v179 = vld [vmem:[#allocation7 + $0xc] sm:$0xf]
    %v180 = vld [vmem:[#allocation7 + $0x10] sm:$0xf]
    %v181 = vld [vmem:[#allocation7 + $0x14] sm:$0xf]
    %v182 = vld [vmem:[#allocation7 + $0x18] sm:$0xf]
    %v183 = vld [vmem:[#allocation7 + $0x1c] sm:$0xf]
    %v184 = vld [vmem:[#allocation7 + $0x20] sm:$0xf]
    %v185 = vld [vmem:[#allocation7 + $0x24] sm:$0xf]
    %v186 = vld [vmem:[#allocation7 + $0x28] sm:$0xf]
    %v187 = vld [vmem:[#allocation7 + $0x2c] sm:$0xf]
    %v188 = vld [vmem:[#allocation7 + $0x30] sm:$0xf]
    %v189 = vld [vmem:[#allocation7 + $0x34] sm:$0xf]
    %v190 = vld [vmem:[#allocation7 + $0x38] sm:$0xf]
    %v191 = vld [vmem:[#allocation7 + $0x3c] sm:$0xf]
    %v192 = vld [vmem:[%s4] sm:$0x1]
    %v194 = vlaneseq
    %v195 = vshrl.u32 %v194, 7
    %v196 = vsub.s32 0, %v195
    %v197 = vrot.slane %v192, %v196
    %v215 = vunpack.c.l.b16 %v176
    %v216 = vunpack.c.l.b16 %v177
    %v217 = vunpack.c.l.b16 %v178
    %v218 = vunpack.c.l.b16 %v179
    %v219 = vunpack.c.l.b16 %v180
    %v220 = vunpack.c.l.b16 %v181
    %v221 = vunpack.c.l.b16 %v182
    %v222 = vunpack.c.l.b16 %v183
    %v223 = vunpack.c.l.b16 %v184
    %v224 = vunpack.c.l.b16 %v185
    %v225 = vunpack.c.l.b16 %v186
    %v226 = vunpack.c.l.b16 %v187
    %v227 = vunpack.c.l.b16 %v188
    %v228 = vunpack.c.l.b16 %v189
    %v229 = vunpack.c.l.b16 %v190
    %v230 = vunpack.c.l.b16 %v191
    %v231 = vpack.c.b16 %v216, %v215
    %v232 = vpack.c.b16 %v218, %v217
    %v233 = vpack.c.b16 %v220, %v219
    %v234 = vpack.c.b16 %v222, %v221
    %v235 = vpack.c.b16 %v224, %v223
    %v236 = vpack.c.b16 %v226, %v225
    %v237 = vpack.c.b16 %v228, %v227
    %v238 = vpack.c.b16 %v230, %v229
    %247 = vmatprep.subr.bf16.mxu0 0
    %248 = vmatpush1.bf16.msra.mxu0 %v231
    %249 = vmatprep.subr.bf16.mxu0 0
    %250 = vmatpush1.bf16.msra.mxu0 %v232
    %251 = vmatprep.subr.bf16.mxu0 0
    %252 = vmatpush1.bf16.msra.mxu0 %v233
    %253 = vmatprep.subr.bf16.mxu0 0
    %254 = vmatpush1.bf16.msra.mxu0 %v234
    %255 = vmatprep.subr.bf16.mxu0 0
    %256 = vmatpush1.bf16.msra.mxu0 %v235
    %257 = vmatprep.subr.bf16.mxu0 0
    %258 = vmatpush1.bf16.msra.mxu0 %v236
    %259 = vmatprep.subr.bf16.mxu0 0
    %260 = vmatpush1.bf16.msra.mxu0 %v237
    %261 = vmatprep.subr.bf16.mxu0 0
    %262 = vmatpush1.bf16.msra.mxu0 %v238
    %263 = vmatprep.subr.bf16.mxu0 0
    %264 = vmatpush1.bf16.msra.mxu0 0
    %265 = vmatprep.subr.bf16.mxu0 0
    %266 = vmatpush1.bf16.msra.mxu0 0
    %267 = vmatprep.subr.bf16.mxu0 0
    %268 = vmatpush1.bf16.msra.mxu0 0
    %269 = vmatprep.subr.bf16.mxu0 0
    %270 = vmatpush1.bf16.msra.mxu0 0
    %271 = vmatprep.subr.bf16.mxu0 0
    %272 = vmatpush1.bf16.msra.mxu0 0
    %273 = vmatprep.subr.bf16.mxu0 0
    %274 = vmatpush1.bf16.msra.mxu0 0
    %275 = vmatprep.subr.bf16.mxu0 0
    %276 = vmatpush1.bf16.msra.mxu0 0
    %277 = vmatprep.subr.bf16.mxu0 0
    %278 = vmatpush1.bf16.msra.mxu0 0
    %279 = vmatprep.mubr.bf16.mxu0 0
    %280 = vmatmul.mubr.bf16.gmra.mrb[0].mxu0 %v175
    %v281 = vpop.f32.mrb[0].mxu0
    %v282 = vadd.f32 %v197, %v281
    %v283 = vpop.f32.mrb[0].mxu0
    %v284 = vpop.f32.mrb[0].mxu0
    %v285 = vpop.f32.mrb[0].mxu0
    %286 = vdwg.mxu0
    %v287 = vadd.f32 %v282, %v62
    %288 = vst [vmem:[#allocation8] sm:$0xff] %v287
    // Predicated region
    $region34: #{tpu_custom_call.1} parent=1 // pred_check
      _
    $region35: #{tpu_custom_call.1} parent=1 // pred_check_branch
      %290 = sbr.rel (0) target = $region37
    $region36: #{tpu_custom_call.1} parent=1 // pred_region
      %s292 = ssub.s32 128, 128
      %293 = vsyncadd [#allocation4], %s292
      %s295 = sshll.u32 [#allocation8], 4
      %s296 = int_to_ptr.vmem [resolvable:$true] %s295
      %298 = dma.vmem_to_hbm [thread:$0]  %s296, 128, %s5, [#allocation4]
    $region37: #{tpu_custom_call.1} parent=1 // pred_fallthru
      _
    // Predicated region
    $region38: #{tpu_custom_call.1} parent=1 // pred_check
      _
    $region39: #{tpu_custom_call.1} parent=1 // pred_check_branch
      %300 = sbr.rel (0) target = $region41
    $region40: #{tpu_custom_call.1} parent=1 // pred_region
      %301 = dma.done [#allocation4], 128
    $region41: #{tpu_custom_call.1} parent=1 // pred_fallthru
      _
    %302 = vsyncpa [#allocation3], 1
    %303 = vsyncpa [#allocation6], 1
    %304 = vsyncpa [#allocation4], 1

</llo_original>
